<compile_context>
chip_gen: v7x
topology: tpu7x:2x2x1
jax: 0.10.0
libtpu: 0.0.40
codegen_flags: <defaults>
</compile_context>

<pallas_src>
import jax
import jax.numpy as jnp
from jax.experimental import pallas as pl
from jax.experimental.pallas import tpu as pltpu

EPS = 1e-5  # PyTorch BatchNorm1d default eps


def projector_kernel(z_ref, w1_ref, w2_ref, w3_ref,
                     g1_ref, b1_ref, g2_ref, b2_ref, o_ref):
    B, tT, D = z_ref.shape
    D2 = w1_ref.shape[1]
    R = B * tT                       # matmul rows for this tile (b-major rows)
    inv_n = 1.0 / (B * D2)           # elements reduced per BN channel
    lowp = z_ref.dtype != jnp.float32
    mm_dtype = z_ref.dtype           # dtype fed to the MXU for layers 2/3

    def bn(h, gamma, beta):
        """Training-mode BatchNorm per channel t, stats over (batch, feature).

        h: (R, D2) f32 with rows ordered b-major (row = b*tT + t).
        Returns the normalized tile as a (B, tT, D2) f32 array.
        Centered (two-pass) variance avoids E[h^2]-E[h]^2 cancellation.
        """
        h3 = h.reshape(B, tT, D2)                     # leading-dim split: relayout-free
        mean = jnp.sum(jnp.sum(h3, axis=2, keepdims=True), axis=0) * inv_n   # (tT, 1)
        hc = h3 - mean[None]                                                 # centered
        var = jnp.sum(jnp.sum(hc * hc, axis=2, keepdims=True), axis=0) * inv_n
        inv = jax.lax.rsqrt(var + EPS)                # EUP slot
        if gamma is not None:
            return hc * (gamma * inv)[None] + beta[None]   # (1, tT, 1) broadcast
        return hc * inv[None]

    def to_mm(a3):
        """(B,tT,D2) f32 -> (R,D2) matmul operand; downcast only for low-precision callers."""
        a2 = a3.reshape(R, D2)
        return a2.astype(mm_dtype) if lowp else a2

    # ---- layer 1: Linear(D -> D2) + BN + ReLU -------------------------------
    x = z_ref[...].reshape(R, D)                      # native dtype feeds the MXU
    h = jnp.dot(x, w1_ref[...], preferred_element_type=jnp.float32)
    a = jnp.maximum(bn(h, g1_ref[...], b1_ref[...]), 0.0)

    # ---- layer 2: Linear(D2 -> D2) + BN + ReLU ------------------------------
    h = jnp.dot(to_mm(a), w2_ref[...], preferred_element_type=jnp.float32)
    a = jnp.maximum(bn(h, g2_ref[...], b2_ref[...]), 0.0)

    # ---- layer 3: Linear(D2 -> D2) + affine-free BN -------------------------
    h = jnp.dot(to_mm(a), w3_ref[...], preferred_element_type=jnp.float32)
    o_ref[...] = bn(h, None, None).astype(o_ref.dtype)


def _tpu_hw():
    """(vmem_capacity_bytes, device_kind) with conservative fallbacks."""
    cap = None
    try:
        info = pltpu.get_tpu_info()
        cap = int(getattr(info, "vmem_capacity_bytes", 0)) or None
    except Exception:
        cap = None
    if cap is None:
        cap = 64 << 20               # conservative: v7x per-TensorCore VMEM
    try:
        kind = jax.devices()[0].device_kind.lower()
    except Exception:
        kind = ""
    return cap, kind


def _pick_tiling(B, T, D, D2, in_dtype, out_dtype, w_dtype):
    """Choose (t_tile, input_buffer_count, vmem_limit_bytes) per TPU generation."""
    cap, kind = _tpu_hw()
    is_v7x = "7" in kind
    is_v5 = "v5" in kind
    budget = min(cap // 2, 64 << 20)               # ~32 MiB v7x, ~64 MiB v5e/v6e
    vmem_limit = int(min(cap * 3 // 4, 96 << 20))  # ~48 MiB v7x, ~96 MiB v5e/v6e
    min_rows = 128 if is_v5 else 256               # keep matmul M >= MXU height
    min_steps = 4 if is_v7x else 2                 # >= 2 grid steps per v7x TensorCore

    in_sz = jnp.dtype(in_dtype).itemsize
    out_sz = jnp.dtype(out_dtype).itemsize
    w_sz = jnp.dtype(w_dtype).itemsize
    w_bytes = (D * D2 + 2 * D2 * D2) * w_sz        # resident, single-buffered weights

    def footprint(tt, n_buf):
        rows = B * tt
        z_b = n_buf * rows * D * in_sz             # pipelined input buffers
        o_b = n_buf * rows * D2 * out_sz           # pipelined output buffers
        p_b = 4 * n_buf * tt * 128 * 4             # (tT,1) BN param blocks, lane-padded
        live = 3 * rows * max(D, D2) * 4           # live f32 intermediates (h/centered/act)
        return z_b + o_b + p_b + live + w_bytes

    # Tiny problem: one full-extent block beats paying per-step grid overhead +
    # masked partial stores just to overlap a sub-microsecond DMA.
    if footprint(T, 1) <= (2 << 20):
        return T, 2, vmem_limit

    cands = [t for t in range(8, T + 1, 8) if T % t == 0]
    if not cands:
        return T, 2, vmem_limit                    # T not tileable by 8: full extent
    fitting = [t for t in cands if footprint(t, 2) <= budget] or [cands[0]]
    good = [t for t in fitting if B * t >= min_rows and T // t >= min_steps]
    if good:
        tt = max(good)
    else:
        multi = [t for t in fitting if T // t >= min_steps]
        tt = max(multi) if multi else max(fitting)
    # 3-deep input buffering when several steps remain and the budget allows.
    # TODO(synk): sweep Buffered(2) vs Buffered(3) on production shapes per generation.
    n_buf = 3 if (T // tt >= 3 and footprint(tt, 3) <= budget) else 2
    return tt, n_buf, vmem_limit


def projector_forward(z, w1, w2, w3, g1, b1, g2, b2):
    """z: (B, T, D); w*: (in, out) (already transposed from PyTorch's (out, in));
    g*/b*: (dim2, 1) BN affine params (channel axis is T). Requires T == dim2."""
    B, T, D = z.shape
    D2 = w1.shape[1]
    assert T == D2, "BatchNorm1d(dim2) on a 3-D input requires z.shape[1] == dim2"
    assert g1.shape == (D2, 1) and b1.shape == (D2, 1)

    out_dtype = z.dtype   # emit in caller dtype (no silent f32 upcast / 2x writeback)
    tT, n_buf, vmem_limit = _pick_tiling(B, T, D, D2, z.dtype, out_dtype, w1.dtype)
    grid = (T // tT,)

    if n_buf > 2 and grid[0] > 1:
        z_spec = pl.BlockSpec((B, tT, D), lambda i: (0, i, 0),
                              pipeline_mode=pl.Buffered(n_buf))
    else:
        z_spec = pl.BlockSpec((B, tT, D), lambda i: (0, i, 0))
    # Whole-array, single-buffered VMEM residents for the weights.
    w_spec = pl.BlockSpec(memory_space=pltpu.MemorySpace.VMEM)
    p_spec = pl.BlockSpec((tT, 1), lambda i: (i, 0))      # per-channel BN params
    o_spec = pl.BlockSpec((B, tT, D2), lambda i: (0, i, 0))

    return pl.pallas_call(
        projector_kernel,
        out_shape=jax.ShapeDtypeStruct((B, T, D2), out_dtype),
        grid=grid,
        in_specs=[z_spec, w_spec, w_spec, w_spec, p_spec, p_spec, p_spec, p_spec],
        out_specs=o_spec,
        compiler_params=pltpu.CompilerParams(
            dimension_semantics=("parallel",),            # grid split across v7x TCs
            vmem_limit_bytes=vmem_limit,
        ),
    )(z, w1, w2, w3, g1, b1, g2, b2)


def projector_reference(z, w1, w2, w3, g1, b1, g2, b2):
    """Pure-JAX f32 reference (two-pass BN) for correctness checking."""
    def bn(h, gamma, beta):
        mean = jnp.mean(h, axis=(0, 2), keepdims=True)
        var = jnp.mean(jnp.square(h - mean), axis=(0, 2), keepdims=True)
        hn = (h - mean) / jnp.sqrt(var + EPS)
        if gamma is not None:
            hn = hn * gamma[None] + beta[None]
        return hn

    z = z.astype(jnp.float32)
    h = jnp.einsum("btd,de->bte", z, w1.astype(jnp.float32))
    h = jnp.maximum(bn(h, g1, b1), 0.0)
    h = jnp.einsum("bte,ef->btf", h, w2.astype(jnp.float32))
    h = jnp.maximum(bn(h, g2, b2), 0.0)
    h = jnp.einsum("btf,fg->btg", h, w3.astype(jnp.float32))
    return bn(h, None, None)


if __name__ == "__main__":
    # Small shapes consistent with the module: dim=32, dim2=16, batch=4, seq=dim2.
    B, T, DIM, DIM2 = 4, 16, 32, 16

    key = jax.random.PRNGKey(0)
    kz, k1, k2, k3, kg1, kb1, kg2, kb2 = jax.random.split(key, 8)

    z = jax.random.normal(kz, (B, T, DIM), dtype=jnp.float32)

    # Linear weights, stored transposed as (in, out), deterministic init.
    lim1 = 1.0 / jnp.sqrt(DIM)
    lim2 = 1.0 / jnp.sqrt(DIM2)
    w1 = jax.random.uniform(k1, (DIM, DIM2), jnp.float32, -lim1, lim1)
    w2 = jax.random.uniform(k2, (DIM2, DIM2), jnp.float32, -lim2, lim2)
    w3 = jax.random.uniform(k3, (DIM2, DIM2), jnp.float32, -lim2, lim2)

    # BatchNorm affine params (gamma, beta), shape (dim2, 1). (PyTorch default
    # init is ones/zeros; random deterministic values exercise the path.)
    g1 = 1.0 + 0.1 * jax.random.normal(kg1, (DIM2, 1), jnp.float32)
    b1 = 0.1 * jax.random.normal(kb1, (DIM2, 1), jnp.float32)
    g2 = 1.0 + 0.1 * jax.random.normal(kg2, (DIM2, 1), jnp.float32)
    b2 = 0.1 * jax.random.normal(kb2, (DIM2, 1), jnp.float32)

    # f32 path: strict check against the pure-JAX reference.
    out = jax.block_until_ready(projector_forward(z, w1, w2, w3, g1, b1, g2, b2))
    ref = projector_reference(z, w1, w2, w3, g1, b1, g2, b2)
    assert out.shape == (B, T, DIM2) and out.dtype == jnp.float32
    assert jnp.allclose(out, ref, atol=1e-3, rtol=1e-3), "mismatch vs reference"

    # bf16 path smoke test: exercises the low-precision MXU feed + bf16 writeback.
    zb = z.astype(jnp.bfloat16)
    w1b, w2b, w3b = (w.astype(jnp.bfloat16) for w in (w1, w2, w3))
    out_bf16 = jax.block_until_ready(
        projector_forward(zb, w1b, w2b, w3b, g1, b1, g2, b2))
    assert out_bf16.shape == (B, T, DIM2) and out_bf16.dtype == jnp.bfloat16
    assert bool(jnp.all(jnp.isfinite(out_bf16.astype(jnp.float32))))

    print("KERNEL_OK")
</pallas_src>

<mosaic_0001>
module attributes {stable_mosaic.version = 11 : i64} {
  func.func @projector_kernel(%arg0: i32, %arg1: memref<4x16x32xf32, #tpu.memory_space<vmem>>, %arg2: memref<32x16xf32, #tpu.memory_space<vmem>>, %arg3: memref<16x16xf32, #tpu.memory_space<vmem>>, %arg4: memref<16x16xf32, #tpu.memory_space<vmem>>, %arg5: memref<16x1xf32, #tpu.memory_space<vmem>>, %arg6: memref<16x1xf32, #tpu.memory_space<vmem>>, %arg7: memref<16x1xf32, #tpu.memory_space<vmem>>, %arg8: memref<16x1xf32, #tpu.memory_space<vmem>>, %arg9: memref<4x16x16xf32, #tpu.memory_space<vmem>>) attributes {dimension_semantics = [#tpu.dimension_semantics<parallel>], iteration_bounds = array<i64: 1>, scalar_prefetch = 0 : i64, scratch_operands = 0 : i64, tpu.core_type = #tpu.core_type<tc>, window_params = [{transform_indices = @transform_0, window_bounds = array<i64: 4, 16, 32>}, {pipeline_mode = #tpu.pipeline_mode<synchronous>, transform_indices = @transform_1, window_bounds = array<i64: 32, 16>}, {pipeline_mode = #tpu.pipeline_mode<synchronous>, transform_indices = @transform_2, window_bounds = array<i64: 16, 16>}, {pipeline_mode = #tpu.pipeline_mode<synchronous>, transform_indices = @transform_3, window_bounds = array<i64: 16, 16>}, {transform_indices = @transform_4, window_bounds = array<i64: 16, 1>}, {transform_indices = @transform_5, window_bounds = array<i64: 16, 1>}, {transform_indices = @transform_6, window_bounds = array<i64: 16, 1>}, {transform_indices = @transform_7, window_bounds = array<i64: 16, 1>}, {transform_indices = @transform_8, window_bounds = array<i64: 4, 16, 16>}]} {
    %c0 = arith.constant 0 : index
    %c0_0 = arith.constant 0 : index
    %c0_1 = arith.constant 0 : index
    %0 = vector.load %arg1[%c0, %c0_0, %c0_1] : memref<4x16x32xf32, #tpu.memory_space<vmem>>, vector<4x16x32xf32>
    %1 = vector.shape_cast %0 : vector<4x16x32xf32> to vector<64x32xf32>
    %c0_2 = arith.constant 0 : index
    %c0_3 = arith.constant 0 : index
    %2 = vector.load %arg2[%c0_2, %c0_3] : memref<32x16xf32, #tpu.memory_space<vmem>>, vector<32x16xf32>
    %cst = arith.constant dense<0.000000e+00> : vector<64x16xf32>
    %3 = tpu.matmul %1, %2, %cst {dimension_numbers = #tpu.dot_dimension_numbers<[1], [0], [0], [1], [0, 0, 1, 1], [], []>} : vector<64x32xf32>, vector<32x16xf32>, vector<64x16xf32> -> vector<64x16xf32>
    %c0_4 = arith.constant 0 : index
    %c0_5 = arith.constant 0 : index
    %4 = vector.load %arg5[%c0_4, %c0_5] : memref<16x1xf32, #tpu.memory_space<vmem>>, vector<16x1xf32>
    %c0_6 = arith.constant 0 : index
    %c0_7 = arith.constant 0 : index
    %5 = vector.load %arg6[%c0_6, %c0_7] : memref<16x1xf32, #tpu.memory_space<vmem>>, vector<16x1xf32>
    %6 = vector.shape_cast %3 : vector<64x16xf32> to vector<4x16x16xf32>
    %cst_8 = arith.constant dense<0.000000e+00> : vector<4x16xf32>
    %7 = vector.multi_reduction <add>, %6, %cst_8 [2] : vector<4x16x16xf32> to vector<4x16xf32>
    %8 = vector.shape_cast %7 : vector<4x16xf32> to vector<4x16x1xf32>
    %cst_9 = arith.constant dense<0.000000e+00> : vector<16x1xf32>
    %9 = vector.multi_reduction <add>, %8, %cst_9 [0] : vector<4x16x1xf32> to vector<16x1xf32>
    %cst_10 = arith.constant 1.562500e-02 : f32
    %10 = vector.broadcast %cst_10 : f32 to vector<16x1xf32>
    %11 = arith.mulf %9, %10 : vector<16x1xf32>
    %12 = vector.shape_cast %11 : vector<16x1xf32> to vector<1x16x1xf32>
    %13 = vector.broadcast %12 : vector<1x16x1xf32> to vector<4x16x16xf32>
    %14 = arith.subf %6, %13 : vector<4x16x16xf32>
    %15 = arith.mulf %14, %14 : vector<4x16x16xf32>
    %cst_11 = arith.constant dense<0.000000e+00> : vector<4x16xf32>
    %16 = vector.multi_reduction <add>, %15, %cst_11 [2] : vector<4x16x16xf32> to vector<4x16xf32>
    %17 = vector.shape_cast %16 : vector<4x16xf32> to vector<4x16x1xf32>
    %cst_12 = arith.constant dense<0.000000e+00> : vector<16x1xf32>
    %18 = vector.multi_reduction <add>, %17, %cst_12 [0] : vector<4x16x1xf32> to vector<16x1xf32>
    %cst_13 = arith.constant 1.562500e-02 : f32
    %19 = vector.broadcast %cst_13 : f32 to vector<16x1xf32>
    %20 = arith.mulf %18, %19 : vector<16x1xf32>
    %cst_14 = arith.constant 9.99999974E-6 : f32
    %21 = vector.broadcast %cst_14 : f32 to vector<16x1xf32>
    %22 = arith.addf %20, %21 : vector<16x1xf32>
    %23 = math.rsqrt %22 : vector<16x1xf32>
    %24 = arith.mulf %4, %23 : vector<16x1xf32>
    %25 = vector.shape_cast %24 : vector<16x1xf32> to vector<1x16x1xf32>
    %26 = vector.broadcast %25 : vector<1x16x1xf32> to vector<4x16x16xf32>
    %27 = arith.mulf %14, %26 : vector<4x16x16xf32>
    %28 = vector.shape_cast %5 : vector<16x1xf32> to vector<1x16x1xf32>
    %29 = vector.broadcast %28 : vector<1x16x1xf32> to vector<4x16x16xf32>
    %30 = arith.addf %27, %29 : vector<4x16x16xf32>
    %cst_15 = arith.constant 0.000000e+00 : f32
    %31 = vector.broadcast %cst_15 : f32 to vector<4x16x16xf32>
    %32 = arith.maximumf %30, %31 : vector<4x16x16xf32>
    %33 = vector.shape_cast %32 : vector<4x16x16xf32> to vector<64x16xf32>
    %c0_16 = arith.constant 0 : index
    %c0_17 = arith.constant 0 : index
    %34 = vector.load %arg3[%c0_16, %c0_17] : memref<16x16xf32, #tpu.memory_space<vmem>>, vector<16x16xf32>
    %cst_18 = arith.constant dense<0.000000e+00> : vector<64x16xf32>
    %35 = tpu.matmul %33, %34, %cst_18 {dimension_numbers = #tpu.dot_dimension_numbers<[1], [0], [0], [1], [0, 0, 1, 1], [], []>} : vector<64x16xf32>, vector<16x16xf32>, vector<64x16xf32> -> vector<64x16xf32>
    %c0_19 = arith.constant 0 : index
    %c0_20 = arith.constant 0 : index
    %36 = vector.load %arg7[%c0_19, %c0_20] : memref<16x1xf32, #tpu.memory_space<vmem>>, vector<16x1xf32>
    %c0_21 = arith.constant 0 : index
    %c0_22 = arith.constant 0 : index
    %37 = vector.load %arg8[%c0_21, %c0_22] : memref<16x1xf32, #tpu.memory_space<vmem>>, vector<16x1xf32>
    %38 = vector.shape_cast %35 : vector<64x16xf32> to vector<4x16x16xf32>
    %cst_23 = arith.constant dense<0.000000e+00> : vector<4x16xf32>
    %39 = vector.multi_reduction <add>, %38, %cst_23 [2] : vector<4x16x16xf32> to vector<4x16xf32>
    %40 = vector.shape_cast %39 : vector<4x16xf32> to vector<4x16x1xf32>
    %cst_24 = arith.constant dense<0.000000e+00> : vector<16x1xf32>
    %41 = vector.multi_reduction <add>, %40, %cst_24 [0] : vector<4x16x1xf32> to vector<16x1xf32>
    %cst_25 = arith.constant 1.562500e-02 : f32
    %42 = vector.broadcast %cst_25 : f32 to vector<16x1xf32>
    %43 = arith.mulf %41, %42 : vector<16x1xf32>
    %44 = vector.shape_cast %43 : vector<16x1xf32> to vector<1x16x1xf32>
    %45 = vector.broadcast %44 : vector<1x16x1xf32> to vector<4x16x16xf32>
    %46 = arith.subf %38, %45 : vector<4x16x16xf32>
    %47 = arith.mulf %46, %46 : vector<4x16x16xf32>
    %cst_26 = arith.constant dense<0.000000e+00> : vector<4x16xf32>
    %48 = vector.multi_reduction <add>, %47, %cst_26 [2] : vector<4x16x16xf32> to vector<4x16xf32>
    %49 = vector.shape_cast %48 : vector<4x16xf32> to vector<4x16x1xf32>
    %cst_27 = arith.constant dense<0.000000e+00> : vector<16x1xf32>
    %50 = vector.multi_reduction <add>, %49, %cst_27 [0] : vector<4x16x1xf32> to vector<16x1xf32>
    %cst_28 = arith.constant 1.562500e-02 : f32
    %51 = vector.broadcast %cst_28 : f32 to vector<16x1xf32>
    %52 = arith.mulf %50, %51 : vector<16x1xf32>
    %cst_29 = arith.constant 9.99999974E-6 : f32
    %53 = vector.broadcast %cst_29 : f32 to vector<16x1xf32>
    %54 = arith.addf %52, %53 : vector<16x1xf32>
    %55 = math.rsqrt %54 : vector<16x1xf32>
    %56 = arith.mulf %36, %55 : vector<16x1xf32>
    %57 = vector.shape_cast %56 : vector<16x1xf32> to vector<1x16x1xf32>
    %58 = vector.broadcast %57 : vector<1x16x1xf32> to vector<4x16x16xf32>
    %59 = arith.mulf %46, %58 : vector<4x16x16xf32>
    %60 = vector.shape_cast %37 : vector<16x1xf32> to vector<1x16x1xf32>
    %61 = vector.broadcast %60 : vector<1x16x1xf32> to vector<4x16x16xf32>
    %62 = arith.addf %59, %61 : vector<4x16x16xf32>
    %cst_30 = arith.constant 0.000000e+00 : f32
    %63 = vector.broadcast %cst_30 : f32 to vector<4x16x16xf32>
    %64 = arith.maximumf %62, %63 : vector<4x16x16xf32>
    %65 = vector.shape_cast %64 : vector<4x16x16xf32> to vector<64x16xf32>
    %c0_31 = arith.constant 0 : index
    %c0_32 = arith.constant 0 : index
    %66 = vector.load %arg4[%c0_31, %c0_32] : memref<16x16xf32, #tpu.memory_space<vmem>>, vector<16x16xf32>
    %cst_33 = arith.constant dense<0.000000e+00> : vector<64x16xf32>
    %67 = tpu.matmul %65, %66, %cst_33 {dimension_numbers = #tpu.dot_dimension_numbers<[1], [0], [0], [1], [0, 0, 1, 1], [], []>} : vector<64x16xf32>, vector<16x16xf32>, vector<64x16xf32> -> vector<64x16xf32>
    %68 = vector.shape_cast %67 : vector<64x16xf32> to vector<4x16x16xf32>
    %cst_34 = arith.constant dense<0.000000e+00> : vector<4x16xf32>
    %69 = vector.multi_reduction <add>, %68, %cst_34 [2] : vector<4x16x16xf32> to vector<4x16xf32>
    %70 = vector.shape_cast %69 : vector<4x16xf32> to vector<4x16x1xf32>
    %cst_35 = arith.constant dense<0.000000e+00> : vector<16x1xf32>
    %71 = vector.multi_reduction <add>, %70, %cst_35 [0] : vector<4x16x1xf32> to vector<16x1xf32>
    %cst_36 = arith.constant 1.562500e-02 : f32
    %72 = vector.broadcast %cst_36 : f32 to vector<16x1xf32>
    %73 = arith.mulf %71, %72 : vector<16x1xf32>
    %74 = vector.shape_cast %73 : vector<16x1xf32> to vector<1x16x1xf32>
    %75 = vector.broadcast %74 : vector<1x16x1xf32> to vector<4x16x16xf32>
    %76 = arith.subf %68, %75 : vector<4x16x16xf32>
    %77 = arith.mulf %76, %76 : vector<4x16x16xf32>
    %cst_37 = arith.constant dense<0.000000e+00> : vector<4x16xf32>
    %78 = vector.multi_reduction <add>, %77, %cst_37 [2] : vector<4x16x16xf32> to vector<4x16xf32>
    %79 = vector.shape_cast %78 : vector<4x16xf32> to vector<4x16x1xf32>
    %cst_38 = arith.constant dense<0.000000e+00> : vector<16x1xf32>
    %80 = vector.multi_reduction <add>, %79, %cst_38 [0] : vector<4x16x1xf32> to vector<16x1xf32>
    %cst_39 = arith.constant 1.562500e-02 : f32
    %81 = vector.broadcast %cst_39 : f32 to vector<16x1xf32>
    %82 = arith.mulf %80, %81 : vector<16x1xf32>
    %cst_40 = arith.constant 9.99999974E-6 : f32
    %83 = vector.broadcast %cst_40 : f32 to vector<16x1xf32>
    %84 = arith.addf %82, %83 : vector<16x1xf32>
    %85 = math.rsqrt %84 : vector<16x1xf32>
    %86 = vector.shape_cast %85 : vector<16x1xf32> to vector<1x16x1xf32>
    %87 = vector.broadcast %86 : vector<1x16x1xf32> to vector<4x16x16xf32>
    %88 = arith.mulf %76, %87 : vector<4x16x16xf32>
    %c0_41 = arith.constant 0 : index
    %c0_42 = arith.constant 0 : index
    %c0_43 = arith.constant 0 : index
    %89 = vector.load %arg9[%c0_41, %c0_42, %c0_43] : memref<4x16x16xf32, #tpu.memory_space<vmem>>, vector<4x16x16xf32>
    tpu.vector_store %arg9[%c0_41, %c0_42, %c0_43], %88 {strides = array<i32>} : memref<4x16x16xf32, #tpu.memory_space<vmem>>, vector<4x16x16xf32>,
    return
  }
  func.func @transform_0(%arg0: i32) -> (i32, i32, i32) {
    %c0_i32 = arith.constant 0 : i32
    %c0_i32_0 = arith.constant 0 : i32
    %c0_i32_1 = arith.constant 0 : i32
    return %c0_i32, %arg0, %c0_i32_0 : i32, i32, i32
  }
  func.func @transform_1(%arg0: i32) -> (i32, i32) {
    %c0_i32 = arith.constant 0 : i32
    %c0_i32_0 = arith.constant 0 : i32
    %c0_i32_1 = arith.constant 0 : i32
    return %c0_i32, %c0_i32_0 : i32, i32
  }
  func.func @transform_2(%arg0: i32) -> (i32, i32) {
    %c0_i32 = arith.constant 0 : i32
    %c0_i32_0 = arith.constant 0 : i32
    %c0_i32_1 = arith.constant 0 : i32
    return %c0_i32, %c0_i32_0 : i32, i32
  }
  func.func @transform_3(%arg0: i32) -> (i32, i32) {
    %c0_i32 = arith.constant 0 : i32
    %c0_i32_0 = arith.constant 0 : i32
    %c0_i32_1 = arith.constant 0 : i32
    return %c0_i32, %c0_i32_0 : i32, i32
  }
  func.func @transform_4(%arg0: i32) -> (i32, i32) {
    %c0_i32 = arith.constant 0 : i32
    %c0_i32_0 = arith.constant 0 : i32
    return %arg0, %c0_i32 : i32, i32
  }
  func.func @transform_5(%arg0: i32) -> (i32, i32) {
    %c0_i32 = arith.constant 0 : i32
    %c0_i32_0 = arith.constant 0 : i32
    return %arg0, %c0_i32 : i32, i32
  }
  func.func @transform_6(%arg0: i32) -> (i32, i32) {
    %c0_i32 = arith.constant 0 : i32
    %c0_i32_0 = arith.constant 0 : i32
    return %arg0, %c0_i32 : i32, i32
  }
  func.func @transform_7(%arg0: i32) -> (i32, i32) {
    %c0_i32 = arith.constant 0 : i32
    %c0_i32_0 = arith.constant 0 : i32
    return %arg0, %c0_i32 : i32, i32
  }
  func.func @transform_8(%arg0: i32) -> (i32, i32, i32) {
    %c0_i32 = arith.constant 0 : i32
    %c0_i32_0 = arith.constant 0 : i32
    %c0_i32_1 = arith.constant 0 : i32
    return %c0_i32, %arg0, %c0_i32_0 : i32, i32, i32
  }
}

</mosaic_0001>

<llo_original>
// kernel: tpu_custom_call.1
$region0: #{tpu_custom_call.1}
  #allocation0 [shape = 'u32[]', space=smem, size = 0x4, offset = 0x4, fixed_abs, tag = 'smem constant byte address 0x4 - core index']
  #allocation1 [shape = 'u32[144,128]{1,0:T(1,128)}', space=vmem, size = 0x12000, scoped, tag = 'internal scratch']
  %s0 = inlined_call_operand.vmem [shape: f32[4,16,32], index: 0, kind: input, shape index: {}]
  %s1 = inlined_call_operand.vmem [shape: f32[32,16], index: 1, kind: input, shape index: {}]
  %s2 = inlined_call_operand.vmem [shape: f32[16,16], index: 2, kind: input, shape index: {}]
  %s3 = inlined_call_operand.vmem [shape: f32[16,16], index: 3, kind: input, shape index: {}]
  %s4 = inlined_call_operand.vmem [shape: f32[16,1], index: 4, kind: input, shape index: {}]
  %s5 = inlined_call_operand.vmem [shape: f32[16,1], index: 5, kind: input, shape index: {}]
  %s6 = inlined_call_operand.vmem [shape: f32[16,1], index: 6, kind: input, shape index: {}]
  %s7 = inlined_call_operand.vmem [shape: f32[16,1], index: 7, kind: input, shape index: {}]
  %s8 = inlined_call_operand.hbm [shape: f32[4,16,16], index: 8, kind: output, shape index: {}]
  %s9 = sld [smem:[#allocation0]]
  $region42: #{tpu_custom_call.1} parent=0
    _
  %s11 = ssub.s32 1, %s9
  %s12 = scalar_select 0, %s11, %s9
  $region1: #{tpu_custom_call.1} parent=0
    #allocation2 [shape = 'u8[32768]{0}', space=vmem, size = 0x8000, scoped, tag = 'output window, operand 0, single buffered']
    #allocation3 [shape = 's32[1]{0}', space=sflag, size = 0x4, scoped, tag = 'scoped memory for tpu_custom_call.1']
    %13 = vsyncpa [#allocation3], 0
    // Predicated region
    $region2: #{tpu_custom_call.1} parent=1 // pred_check
      _
    $region3: #{tpu_custom_call.1} parent=1 // pred_check_branch
      %15 = sbr.rel (0) target = $region5
    $region4: #{tpu_custom_call.1} parent=1 // pred_region
      _
    $region5: #{tpu_custom_call.1} parent=1 // pred_fallthru
      _
    // Predicated region
    $region6: #{tpu_custom_call.1} parent=1 // pred_check
      _
    $region7: #{tpu_custom_call.1} parent=1 // pred_check_branch
      %17 = sbr.rel (0) target = $region9
    $region8: #{tpu_custom_call.1} parent=1 // pred_region
      _
    $region9: #{tpu_custom_call.1} parent=1 // pred_fallthru
      _
    // Predicated region
    $region10: #{tpu_custom_call.1} parent=1 // pred_check
      _
    $region11: #{tpu_custom_call.1} parent=1 // pred_check_branch
      %19 = sbr.rel (0) target = $region13
    $region12: #{tpu_custom_call.1} parent=1 // pred_region
      _
    $region13: #{tpu_custom_call.1} parent=1 // pred_fallthru
      _
    // Predicated region
    $region14: #{tpu_custom_call.1} parent=1 // pred_check
      _
    $region15: #{tpu_custom_call.1} parent=1 // pred_check_branch
      %21 = sbr.rel (0) target = $region17
    $region16: #{tpu_custom_call.1} parent=1 // pred_region
      _
    $region17: #{tpu_custom_call.1} parent=1 // pred_fallthru
      _
    // Predicated region
    $region18: #{tpu_custom_call.1} parent=1 // pred_check
      _
    $region19: #{tpu_custom_call.1} parent=1 // pred_check_branch
      %23 = sbr.rel (0) target = $region21
    $region20: #{tpu_custom_call.1} parent=1 // pred_region
      _
    $region21: #{tpu_custom_call.1} parent=1 // pred_fallthru
      _
    // Predicated region
    $region22: #{tpu_custom_call.1} parent=1 // pred_check
      _
    $region23: #{tpu_custom_call.1} parent=1 // pred_check_branch
      %25 = sbr.rel (0) target = $region25
    $region24: #{tpu_custom_call.1} parent=1 // pred_region
      _
    $region25: #{tpu_custom_call.1} parent=1 // pred_fallthru
      _
    // Predicated region
    $region26: #{tpu_custom_call.1} parent=1 // pred_check
      _
    $region27: #{tpu_custom_call.1} parent=1 // pred_check_branch
      %27 = sbr.rel (0) target = $region29
    $region28: #{tpu_custom_call.1} parent=1 // pred_region
      _
    $region29: #{tpu_custom_call.1} parent=1 // pred_fallthru
      _
    // Predicated region
    $region30: #{tpu_custom_call.1} parent=1 // pred_check
      _
    $region31: #{tpu_custom_call.1} parent=1 // pred_check_branch
      %29 = sbr.rel (0) target = $region33
    $region32: #{tpu_custom_call.1} parent=1 // pred_region
      _
    $region33: #{tpu_custom_call.1} parent=1 // pred_fallthru
      _
    %v30 = vld [vmem:[%s0] sm:$0xff]
    %v31 = vld [vmem:[%s0 + $0x8] sm:$0xff]
    %v32 = vld [vmem:[%s0 + $0x10] sm:$0xff]
    %v33 = vld [vmem:[%s0 + $0x18] sm:$0xff]
    %v34 = vld [vmem:[%s0 + $0x20] sm:$0xff]
    %v35 = vld [vmem:[%s0 + $0x28] sm:$0xff]
    %v36 = vld [vmem:[%s0 + $0x30] sm:$0xff]
    %v37 = vld [vmem:[%s0 + $0x38] sm:$0xff]
    %v38 = vld [vmem:[%s1] sm:$0xff]
    %v39 = vld [vmem:[%s1 + $0x8] sm:$0xff]
    %v40 = vld [vmem:[%s1 + $0x10] sm:$0xff]
    %v41 = vld [vmem:[%s1 + $0x18] sm:$0xff]
    %vm42 = vcmask 261120
    %v44 = vsel %vm42, %v30, 0
    %v47 = vsel %vm42, %v31, 0
    %v50 = vsel %vm42, %v32, 0
    %v53 = vsel %vm42, %v33, 0
    %v56 = vsel %vm42, %v34, 0
    %v59 = vsel %vm42, %v35, 0
    %v62 = vsel %vm42, %v36, 0
    %v65 = vsel %vm42, %v37, 0
    %67 = vmatprep.subr.mxu0 0.0
    %68 = vmatpush1.msra.mxu0 %v38
    %69 = vmatprep.subr.mxu0 0.0
    %70 = vmatpush1.msra.mxu0 %v39
    %71 = vmatprep.subr.mxu0 0.0
    %72 = vmatpush1.msra.mxu0 %v40
    %73 = vmatprep.subr.mxu0 0.0
    %74 = vmatpush1.msra.mxu0 %v41
    %75 = vmatprep.subr.mxu0 0.0
    %76 = vmatpush1.msra.mxu0 0.0
    %77 = vmatprep.subr.mxu0 0.0
    %78 = vmatpush1.msra.mxu0 0.0
    %79 = vmatprep.subr.mxu0 0.0
    %80 = vmatpush1.msra.mxu0 0.0
    %81 = vmatprep.subr.mxu0 0.0
    %82 = vmatpush1.msra.mxu0 0.0
    %83 = vmatprep.subr.mxu0 0.0
    %84 = vmatpush1.msra.mxu0 0.0
    %85 = vmatprep.subr.mxu0 0.0
    %86 = vmatpush1.msra.mxu0 0.0
    %87 = vmatprep.subr.mxu0 0.0
    %88 = vmatpush1.msra.mxu0 0.0
    %89 = vmatprep.subr.mxu0 0.0
    %90 = vmatpush1.msra.mxu0 0.0
    %91 = vmatprep.subr.mxu0 0.0
    %92 = vmatpush1.msra.mxu0 0.0
    %93 = vmatprep.subr.mxu0 0.0
    %94 = vmatpush1.msra.mxu0 0.0
    %95 = vmatprep.subr.mxu0 0.0
    %96 = vmatpush1.msra.mxu0 0.0
    %97 = vmatprep.subr.mxu0 0.0
    %98 = vmatpush1.msra.mxu0 0.0
    %99 = vmatprep.subr.mxu0 0.0
    %100 = vmatpush1.msra.mxu0 0.0
    %101 = vmatprep.subr.mxu0 0.0
    %102 = vmatpush1.msra.mxu0 0.0
    %103 = vmatprep.subr.mxu0 0.0
    %104 = vmatpush1.msra.mxu0 0.0
    %105 = vmatprep.subr.mxu0 0.0
    %106 = vmatpush1.msra.mxu0 0.0
    %107 = vmatprep.subr.mxu0 0.0
    %108 = vmatpush1.msra.mxu0 0.0
    %109 = vmatprep.subr.mxu0 0.0
    %110 = vmatpush1.msra.mxu0 0.0
    %111 = vmatprep.subr.mxu0 0.0
    %112 = vmatpush1.msra.mxu0 0.0
    %113 = vmatprep.subr.mxu0 0.0
    %114 = vmatpush1.msra.mxu0 0.0
    %115 = vmatprep.subr.mxu0 0.0
    %116 = vmatpush1.msra.mxu0 0.0
    %117 = vmatprep.subr.mxu0 0.0
    %118 = vmatpush1.msra.mxu0 0.0
    %119 = vmatprep.subr.mxu0 0.0
    %120 = vmatpush1.msra.mxu0 0.0
    %121 = vmatprep.subr.mxu0 0.0
    %122 = vmatpush1.msra.mxu0 0.0
    %123 = vmatprep.subr.mxu0 0.0
    %124 = vmatpush1.msra.mxu0 0.0
    %125 = vmatprep.subr.mxu0 0.0
    %126 = vmatpush1.msra.mxu0 0.0
    %127 = vmatprep.subr.mxu0 0.0
    %128 = vmatpush1.msra.mxu0 0.0
    %129 = vmatprep.subr.mxu0 0.0
    %130 = vmatpush1.msra.mxu0 0.0
    %131 = vmatprep.mubr.f32.mxu0 0.0
    %132 = vmatmul.mubr.f32.gmra.mrb[0].mxu0 %v44
    %v133 = vpop.f32.mrb[0].mxu0
    %v134 = vadd.f32 0.0, %v133
    %v135 = vpop.f32.mrb[0].mxu0
    %136 = vmatprep.mubr.f32.mxu0 0.0
    %137 = vmatmul.mubr.f32.gmra.mrb[0].mxu0 %v47
    %v138 = vpop.f32.mrb[0].mxu0
    %v139 = vadd.f32 0.0, %v138
    %v140 = vpop.f32.mrb[0].mxu0
    %141 = vmatprep.mubr.f32.mxu0 0.0
    %142 = vmatmul.mubr.f32.gmra.mrb[0].mxu0 %v50
    %v143 = vpop.f32.mrb[0].mxu0
    %v144 = vadd.f32 0.0, %v143
    %v145 = vpop.f32.mrb[0].mxu0
    %146 = vmatprep.mubr.f32.mxu0 0.0
    %147 = vmatmul.mubr.f32.gmra.mrb[0].mxu0 %v53
    %v148 = vpop.f32.mrb[0].mxu0
    %v149 = vadd.f32 0.0, %v148
    %v150 = vpop.f32.mrb[0].mxu0
    %151 = vmatprep.mubr.f32.mxu0 0.0
    %152 = vmatmul.mubr.f32.gmra.mrb[0].mxu0 %v56
    %v153 = vpop.f32.mrb[0].mxu0
    %v154 = vadd.f32 0.0, %v153
    %v155 = vpop.f32.mrb[0].mxu0
    %156 = vmatprep.mubr.f32.mxu0 0.0
    %157 = vmatmul.mubr.f32.gmra.mrb[0].mxu0 %v59
    %v158 = vpop.f32.mrb[0].mxu0
    %v159 = vadd.f32 0.0, %v158
    %v160 = vpop.f32.mrb[0].mxu0
    %161 = vmatprep.mubr.f32.mxu0 0.0
    %162 = vmatmul.mubr.f32.gmra.mrb[0].mxu0 %v62
    %v163 = vpop.f32.mrb[0].mxu0
    %v164 = vadd.f32 0.0, %v163
    %v165 = vpop.f32.mrb[0].mxu0
    %166 = vmatprep.mubr.f32.mxu0 0.0
    %167 = vmatmul.mubr.f32.gmra.mrb[0].mxu0 %v65
    %v168 = vpop.f32.mrb[0].mxu0
    %v169 = vadd.f32 0.0, %v168
    %v170 = vpop.f32.mrb[0].mxu0
    %171 = vdwg.mxu0
    %v172 = vld [vmem:[%s4] sm:$0xff]
    %v173 = vld [vmem:[%s4 + $0x8] sm:$0xff]
    %v174 = vld [vmem:[%s5] sm:$0xff]
    %v175 = vld [vmem:[%s5 + $0x8] sm:$0xff]
    %vm176 = vcmask 130048
    %v177 = vsel %vm176, %v134, 0.0
    %178 = vadd.xlane.f32.xlu0 %v177
    %v179 = vpop.xlane.xlu0 %178
    %v180 = vsel %vm176, %v139, 0.0
    %181 = vadd.xlane.f32.xlu0 %v180
    %v182 = vpop.xlane.xlu0 %181
    %v183 = vsel %vm176, %v144, 0.0
    %184 = vadd.xlane.f32.xlu0 %v183
    %v185 = vpop.xlane.xlu0 %184
    %v186 = vsel %vm176, %v149, 0.0
    %187 = vadd.xlane.f32.xlu0 %v186
    %v188 = vpop.xlane.xlu0 %187
    %v189 = vsel %vm176, %v154, 0.0
    %190 = vadd.xlane.f32.xlu0 %v189
    %v191 = vpop.xlane.xlu0 %190
    %v192 = vsel %vm176, %v159, 0.0
    %193 = vadd.xlane.f32.xlu0 %v192
    %v194 = vpop.xlane.xlu0 %193
    %v195 = vsel %vm176, %v164, 0.0
    %196 = vadd.xlane.f32.xlu0 %v195
    %v197 = vpop.xlane.xlu0 %196
    %v198 = vsel %vm176, %v169, 0.0
    %199 = vadd.xlane.f32.xlu0 %v198
    %v200 = vpop.xlane.xlu0 %199
    %v201 = vadd.f32 %v179, %v185
    %v202 = vadd.f32 %v201, %v191
    %v203 = vadd.f32 %v202, %v197
    %v204 = vadd.f32 %v182, %v188
    %v205 = vadd.f32 %v204, %v194
    %v206 = vadd.f32 %v205, %v200
    %v207 = vmul.f32 %v203, 0.015625
    %v208 = vmul.f32 %v206, 0.015625
    %v209 = vsub.f32 %v134, %v207
    %v210 = vsub.f32 %v139, %v208
    %v211 = vsub.f32 %v144, %v207
    %v212 = vsub.f32 %v149, %v208
    %v213 = vsub.f32 %v154, %v207
    %v214 = vsub.f32 %v159, %v208
    %v215 = vsub.f32 %v164, %v207
    %v216 = vsub.f32 %v169, %v208
    %v217 = vmul.f32 %v209, %v209
    %v218 = vmul.f32 %v210, %v210
    %v219 = vmul.f32 %v211, %v211
    %v220 = vmul.f32 %v212, %v212
    %v221 = vmul.f32 %v213, %v213
    %v222 = vmul.f32 %v214, %v214
    %v223 = vmul.f32 %v215, %v215
    %v224 = vmul.f32 %v216, %v216
    %v225 = vsel %vm176, %v217, 0.0
    %226 = vadd.xlane.f32.xlu0 %v225
    %v227 = vpop.xlane.xlu0 %226
    %v228 = vsel %vm176, %v218, 0.0
    %229 = vadd.xlane.f32.xlu0 %v228
    %v230 = vpop.xlane.xlu0 %229
    %v231 = vsel %vm176, %v219, 0.0
    %232 = vadd.xlane.f32.xlu0 %v231
    %v233 = vpop.xlane.xlu0 %232
    %v234 = vsel %vm176, %v220, 0.0
    %235 = vadd.xlane.f32.xlu0 %v234
    %v236 = vpop.xlane.xlu0 %235
    %v237 = vsel %vm176, %v221, 0.0
    %238 = vadd.xlane.f32.xlu0 %v237
    %v239 = vpop.xlane.xlu0 %238
    %v240 = vsel %vm176, %v222, 0.0
    %241 = vadd.xlane.f32.xlu0 %v240
    %v242 = vpop.xlane.xlu0 %241
    %v243 = vsel %vm176, %v223, 0.0
    %244 = vadd.xlane.f32.xlu0 %v243
    %v245 = vpop.xlane.xlu0 %244
    %v246 = vsel %vm176, %v224, 0.0
    %247 = vadd.xlane.f32.xlu0 %v246
    %v248 = vpop.xlane.xlu0 %247
    %v249 = vadd.f32 %v227, %v233
    %v250 = vadd.f32 %v249, %v239
    %v251 = vadd.f32 %v250, %v245
    %v252 = vadd.f32 %v230, %v236
    %v253 = vadd.f32 %v252, %v242
    %v254 = vadd.f32 %v253, %v248
    %v255 = vmul.f32 %v251, 0.015625
    %v256 = vmul.f32 %v254, 0.015625
    %v257 = vadd.f32 %v255, 1e-05
    %v258 = vadd.f32 %v256, 1e-05
    %v259 = vrsqrt.pop %v257
    %v260 = vrsqrt.pop %v258
    %v261 = vmul.f32 %v172, %v259
    %v262 = vmul.f32 %v173, %v260
    %264 = vset.pattern.permute.xlu0 0
    %265 = vperm.xlu0 %264, %v261
    %v266 = vpop.permute.xlu0 %265
    %269 = vset.pattern.permute.xlu0 0
    %270 = vperm.xlu0 %269, %v262
    %v271 = vpop.permute.xlu0 %270
    %v273 = vmul.f32 %v209, %v266
    %v274 = vmul.f32 %v210, %v271
    %v275 = vmul.f32 %v211, %v266
    %v276 = vmul.f32 %v212, %v271
    %v277 = vmul.f32 %v213, %v266
    %v278 = vmul.f32 %v214, %v271
    %v279 = vmul.f32 %v215, %v266
    %v280 = vmul.f32 %v216, %v271
    %282 = vset.pattern.permute.xlu0 0
    %283 = vperm.xlu0 %282, %v174
    %v284 = vpop.permute.xlu0 %283
    %287 = vset.pattern.permute.xlu0 0
    %288 = vperm.xlu0 %287, %v175
    %v289 = vpop.permute.xlu0 %288
    %v291 = vadd.f32 %v273, %v284
    %v292 = vadd.f32 %v274, %v289
    %v293 = vadd.f32 %v275, %v284
    %v294 = vadd.f32 %v276, %v289
    %v295 = vadd.f32 %v277, %v284
    %v296 = vadd.f32 %v278, %v289
    %v297 = vadd.f32 %v279, %v284
    %v298 = vadd.f32 %v280, %v289
    %v299 = vmax.f32 %v291, 0.0
    %v300 = vmax.f32 %v292, 0.0
    %v301 = vmax.f32 %v293, 0.0
    %v302 = vmax.f32 %v294, 0.0
    %v303 = vmax.f32 %v295, 0.0
    %v304 = vmax.f32 %v296, 0.0
    %v305 = vmax.f32 %v297, 0.0
    %v306 = vmax.f32 %v298, 0.0
    %v307 = vld [vmem:[%s2] sm:$0xff]
    %v308 = vld [vmem:[%s2 + $0x8] sm:$0xff]
    %v310 = vsel %vm176, %v299, 0
    %v313 = vsel %vm176, %v300, 0
    %v316 = vsel %vm176, %v301, 0
    %v319 = vsel %vm176, %v302, 0
    %v322 = vsel %vm176, %v303, 0
    %v325 = vsel %vm176, %v304, 0
    %v328 = vsel %vm176, %v305, 0
    %v331 = vsel %vm176, %v306, 0
    %333 = vmatprep.subr.mxu0 0.0
    %334 = vmatpush1.msra.mxu0 %v307
    %335 = vmatprep.subr.mxu0 0.0
    %336 = vmatpush1.msra.mxu0 %v308
    %337 = vmatprep.subr.mxu0 0.0
    %338 = vmatpush1.msra.mxu0 0.0
    %339 = vmatprep.subr.mxu0 0.0
    %340 = vmatpush1.msra.mxu0 0.0
    %341 = vmatprep.subr.mxu0 0.0
    %342 = vmatpush1.msra.mxu0 0.0
    %343 = vmatprep.subr.mxu0 0.0
    %344 = vmatpush1.msra.mxu0 0.0
    %345 = vmatprep.subr.mxu0 0.0
    %346 = vmatpush1.msra.mxu0 0.0
    %347 = vmatprep.subr.mxu0 0.0
    %348 = vmatpush1.msra.mxu0 0.0
    %349 = vmatprep.subr.mxu0 0.0
    %350 = vmatpush1.msra.mxu0 0.0
    %351 = vmatprep.subr.mxu0 0.0
    %352 = vmatpush1.msra.mxu0 0.0
    %353 = vmatprep.subr.mxu0 0.0
    %354 = vmatpush1.msra.mxu0 0.0
    %355 = vmatprep.subr.mxu0 0.0
    %356 = vmatpush1.msra.mxu0 0.0
    %357 = vmatprep.subr.mxu0 0.0
    %358 = vmatpush1.msra.mxu0 0.0
    %359 = vmatprep.subr.mxu0 0.0
    %360 = vmatpush1.msra.mxu0 0.0
    %361 = vmatprep.subr.mxu0 0.0
    %362 = vmatpush1.msra.mxu0 0.0
    %363 = vmatprep.subr.mxu0 0.0
    %364 = vmatpush1.msra.mxu0 0.0
    %365 = vmatprep.subr.mxu0 0.0
    %366 = vmatpush1.msra.mxu0 0.0
    %367 = vmatprep.subr.mxu0 0.0
    %368 = vmatpush1.msra.mxu0 0.0
    %369 = vmatprep.subr.mxu0 0.0
    %370 = vmatpush1.msra.mxu0 0.0
    %371 = vmatprep.subr.mxu0 0.0
    %372 = vmatpush1.msra.mxu0 0.0
    %373 = vmatprep.subr.mxu0 0.0
    %374 = vmatpush1.msra.mxu0 0.0
    %375 = vmatprep.subr.mxu0 0.0
    %376 = vmatpush1.msra.mxu0 0.0
    %377 = vmatprep.subr.mxu0 0.0
    %378 = vmatpush1.msra.mxu0 0.0
    %379 = vmatprep.subr.mxu0 0.0
    %380 = vmatpush1.msra.mxu0 0.0
    %381 = vmatprep.subr.mxu0 0.0
    %382 = vmatpush1.msra.mxu0 0.0
    %383 = vmatprep.subr.mxu0 0.0
    %384 = vmatpush1.msra.mxu0 0.0
    %385 = vmatprep.subr.mxu0 0.0
    %386 = vmatpush1.msra.mxu0 0.0
    %387 = vmatprep.subr.mxu0 0.0
    %388 = vmatpush1.msra.mxu0 0.0
    %389 = vmatprep.subr.mxu0 0.0
    %390 = vmatpush1.msra.mxu0 0.0
    %391 = vmatprep.subr.mxu0 0.0
    %392 = vmatpush1.msra.mxu0 0.0
    %393 = vmatprep.subr.mxu0 0.0
    %394 = vmatpush1.msra.mxu0 0.0
    %395 = vmatprep.subr.mxu0 0.0
    %396 = vmatpush1.msra.mxu0 0.0
    %397 = vmatprep.mubr.f32.mxu0 0.0
    %398 = vmatmul.mubr.f32.gmra.mrb[0].mxu0 %v310
    %v399 = vpop.f32.mrb[0].mxu0
    %v400 = vadd.f32 0.0, %v399
    %v401 = vpop.f32.mrb[0].mxu0
    %402 = vmatprep.mubr.f32.mxu0 0.0
    %403 = vmatmul.mubr.f32.gmra.mrb[0].mxu0 %v313
    %v404 = vpop.f32.mrb[0].mxu0
    %v405 = vadd.f32 0.0, %v404
    %v406 = vpop.f32.mrb[0].mxu0
    %407 = vmatprep.mubr.f32.mxu0 0.0
    %408 = vmatmul.mubr.f32.gmra.mrb[0].mxu0 %v316
    %v409 = vpop.f32.mrb[0].mxu0
    %v410 = vadd.f32 0.0, %v409
    %v411 = vpop.f32.mrb[0].mxu0
    %412 = vmatprep.mubr.f32.mxu0 0.0
    %413 = vmatmul.mubr.f32.gmra.mrb[0].mxu0 %v319
    %v414 = vpop.f32.mrb[0].mxu0
    %v415 = vadd.f32 0.0, %v414
    %v416 = vpop.f32.mrb[0].mxu0
    %417 = vmatprep.mubr.f32.mxu0 0.0
    %418 = vmatmul.mubr.f32.gmra.mrb[0].mxu0 %v322
    %v419 = vpop.f32.mrb[0].mxu0
    %v420 = vadd.f32 0.0, %v419
    %v421 = vpop.f32.mrb[0].mxu0
    %422 = vmatprep.mubr.f32.mxu0 0.0
    %423 = vmatmul.mubr.f32.gmra.mrb[0].mxu0 %v325
    %v424 = vpop.f32.mrb[0].mxu0
    %v425 = vadd.f32 0.0, %v424
    %v426 = vpop.f32.mrb[0].mxu0
    %427 = vmatprep.mubr.f32.mxu0 0.0
    %428 = vmatmul.mubr.f32.gmra.mrb[0].mxu0 %v328
    %v429 = vpop.f32.mrb[0].mxu0
    %v430 = vadd.f32 0.0, %v429
    %v431 = vpop.f32.mrb[0].mxu0
    %432 = vmatprep.mubr.f32.mxu0 0.0
    %433 = vmatmul.mubr.f32.gmra.mrb[0].mxu0 %v331
    %v434 = vpop.f32.mrb[0].mxu0
    %v435 = vadd.f32 0.0, %v434
    %v436 = vpop.f32.mrb[0].mxu0
    %437 = vdwg.mxu0
    %v438 = vld [vmem:[%s6] sm:$0xff]
    %v439 = vld [vmem:[%s6 + $0x8] sm:$0xff]
    %v440 = vld [vmem:[%s7] sm:$0xff]
    %v441 = vld [vmem:[%s7 + $0x8] sm:$0xff]
    %v442 = vsel %vm176, %v400, 0.0
    %443 = vadd.xlane.f32.xlu0 %v442
    %v444 = vpop.xlane.xlu0 %443
    %v445 = vsel %vm176, %v405, 0.0
    %446 = vadd.xlane.f32.xlu0 %v445
    %v447 = vpop.xlane.xlu0 %446
    %v448 = vsel %vm176, %v410, 0.0
    %449 = vadd.xlane.f32.xlu0 %v448
    %v450 = vpop.xlane.xlu0 %449
    %v451 = vsel %vm176, %v415, 0.0
    %452 = vadd.xlane.f32.xlu0 %v451
    %v453 = vpop.xlane.xlu0 %452
    %v454 = vsel %vm176, %v420, 0.0
    %455 = vadd.xlane.f32.xlu0 %v454
    %v456 = vpop.xlane.xlu0 %455
    %v457 = vsel %vm176, %v425, 0.0
    %458 = vadd.xlane.f32.xlu0 %v457
    %v459 = vpop.xlane.xlu0 %458
    %v460 = vsel %vm176, %v430, 0.0
    %461 = vadd.xlane.f32.xlu0 %v460
    %v462 = vpop.xlane.xlu0 %461
    %v463 = vsel %vm176, %v435, 0.0
    %464 = vadd.xlane.f32.xlu0 %v463
    %v465 = vpop.xlane.xlu0 %464
    %v466 = vadd.f32 %v444, %v450
    %v467 = vadd.f32 %v466, %v456
    %v468 = vadd.f32 %v467, %v462
    %v469 = vadd.f32 %v447, %v453
    %v470 = vadd.f32 %v469, %v459
    %v471 = vadd.f32 %v470, %v465
    %v472 = vmul.f32 %v468, 0.015625
    %v473 = vmul.f32 %v471, 0.015625
    %v474 = vsub.f32 %v400, %v472
    %v475 = vsub.f32 %v405, %v473
    %v476 = vsub.f32 %v410, %v472
    %v477 = vsub.f32 %v415, %v473
    %v478 = vsub.f32 %v420, %v472
    %v479 = vsub.f32 %v425, %v473
    %v480 = vsub.f32 %v430, %v472
    %v481 = vsub.f32 %v435, %v473
    %v482 = vmul.f32 %v474, %v474
    %v483 = vmul.f32 %v475, %v475
    %v484 = vmul.f32 %v476, %v476
    %v485 = vmul.f32 %v477, %v477
    %v486 = vmul.f32 %v478, %v478
    %v487 = vmul.f32 %v479, %v479
    %v488 = vmul.f32 %v480, %v480
    %v489 = vmul.f32 %v481, %v481
    %v490 = vsel %vm176, %v482, 0.0
    %491 = vadd.xlane.f32.xlu0 %v490
    %v492 = vpop.xlane.xlu0 %491
    %v493 = vsel %vm176, %v483, 0.0
    %494 = vadd.xlane.f32.xlu0 %v493
    %v495 = vpop.xlane.xlu0 %494
    %v496 = vsel %vm176, %v484, 0.0
    %497 = vadd.xlane.f32.xlu0 %v496
    %v498 = vpop.xlane.xlu0 %497
    %v499 = vsel %vm176, %v485, 0.0
    %500 = vadd.xlane.f32.xlu0 %v499
    %v501 = vpop.xlane.xlu0 %500
    %v502 = vsel %vm176, %v486, 0.0
    %503 = vadd.xlane.f32.xlu0 %v502
    %v504 = vpop.xlane.xlu0 %503
    %v505 = vsel %vm176, %v487, 0.0
    %506 = vadd.xlane.f32.xlu0 %v505
    %v507 = vpop.xlane.xlu0 %506
    %v508 = vsel %vm176, %v488, 0.0
    %509 = vadd.xlane.f32.xlu0 %v508
    %v510 = vpop.xlane.xlu0 %509
    %v511 = vsel %vm176, %v489, 0.0
    %512 = vadd.xlane.f32.xlu0 %v511
    %v513 = vpop.xlane.xlu0 %512
    %v514 = vadd.f32 %v492, %v498
    %v515 = vadd.f32 %v514, %v504
    %v516 = vadd.f32 %v515, %v510
    %v517 = vadd.f32 %v495, %v501
    %v518 = vadd.f32 %v517, %v507
    %v519 = vadd.f32 %v518, %v513
    %v520 = vmul.f32 %v516, 0.015625
    %v521 = vmul.f32 %v519, 0.015625
    %v522 = vadd.f32 %v520, 1e-05
    %v523 = vadd.f32 %v521, 1e-05
    %v524 = vrsqrt.pop %v522
    %v525 = vrsqrt.pop %v523
    %v526 = vmul.f32 %v438, %v524
    %v527 = vmul.f32 %v439, %v525
    %529 = vset.pattern.permute.xlu0 0
    %530 = vperm.xlu0 %529, %v526
    %v531 = vpop.permute.xlu0 %530
    %534 = vset.pattern.permute.xlu0 0
    %535 = vperm.xlu0 %534, %v527
    %v536 = vpop.permute.xlu0 %535
    %v538 = vmul.f32 %v474, %v531
    %v539 = vmul.f32 %v475, %v536
    %v540 = vmul.f32 %v476, %v531
    %v541 = vmul.f32 %v477, %v536
    %v542 = vmul.f32 %v478, %v531
    %v543 = vmul.f32 %v479, %v536
    %v544 = vmul.f32 %v480, %v531
    %v545 = vmul.f32 %v481, %v536
    %547 = vset.pattern.permute.xlu0 0
    %548 = vperm.xlu0 %547, %v440
    %v549 = vpop.permute.xlu0 %548
    %552 = vset.pattern.permute.xlu0 0
    %553 = vperm.xlu0 %552, %v441
    %v554 = vpop.permute.xlu0 %553
    %v556 = vadd.f32 %v538, %v549
    %v557 = vadd.f32 %v539, %v554
    %v558 = vadd.f32 %v540, %v549
    %v559 = vadd.f32 %v541, %v554
    %v560 = vadd.f32 %v542, %v549
    %v561 = vadd.f32 %v543, %v554
    %v562 = vadd.f32 %v544, %v549
    %v563 = vadd.f32 %v545, %v554
    %v564 = vmax.f32 %v556, 0.0
    %v565 = vmax.f32 %v557, 0.0
    %v566 = vmax.f32 %v558, 0.0
    %v567 = vmax.f32 %v559, 0.0
    %v568 = vmax.f32 %v560, 0.0
    %v569 = vmax.f32 %v561, 0.0
    %v570 = vmax.f32 %v562, 0.0
    %v571 = vmax.f32 %v563, 0.0
    %v572 = vld [vmem:[%s3] sm:$0xff]
    %v573 = vld [vmem:[%s3 + $0x8] sm:$0xff]
    %v575 = vsel %vm176, %v564, 0
    %v578 = vsel %vm176, %v565, 0
    %v581 = vsel %vm176, %v566, 0
    %v584 = vsel %vm176, %v567, 0
    %v587 = vsel %vm176, %v568, 0
    %v590 = vsel %vm176, %v569, 0
    %v593 = vsel %vm176, %v570, 0
    %v596 = vsel %vm176, %v571, 0
    %598 = vmatprep.subr.mxu0 0.0
    %599 = vmatpush1.msra.mxu0 %v572
    %600 = vmatprep.subr.mxu0 0.0
    %601 = vmatpush1.msra.mxu0 %v573
    %602 = vmatprep.subr.mxu0 0.0
    %603 = vmatpush1.msra.mxu0 0.0
    %604 = vmatprep.subr.mxu0 0.0
    %605 = vmatpush1.msra.mxu0 0.0
    %606 = vmatprep.subr.mxu0 0.0
    %607 = vmatpush1.msra.mxu0 0.0
    %608 = vmatprep.subr.mxu0 0.0
    %609 = vmatpush1.msra.mxu0 0.0
    %610 = vmatprep.subr.mxu0 0.0
    %611 = vmatpush1.msra.mxu0 0.0
    %612 = vmatprep.subr.mxu0 0.0
    %613 = vmatpush1.msra.mxu0 0.0
    %614 = vmatprep.subr.mxu0 0.0
    %615 = vmatpush1.msra.mxu0 0.0
    %616 = vmatprep.subr.mxu0 0.0
    %617 = vmatpush1.msra.mxu0 0.0
    %618 = vmatprep.subr.mxu0 0.0
    %619 = vmatpush1.msra.mxu0 0.0
    %620 = vmatprep.subr.mxu0 0.0
    %621 = vmatpush1.msra.mxu0 0.0
    %622 = vmatprep.subr.mxu0 0.0
    %623 = vmatpush1.msra.mxu0 0.0
    %624 = vmatprep.subr.mxu0 0.0
    %625 = vmatpush1.msra.mxu0 0.0
    %626 = vmatprep.subr.mxu0 0.0
    %627 = vmatpush1.msra.mxu0 0.0
    %628 = vmatprep.subr.mxu0 0.0
    %629 = vmatpush1.msra.mxu0 0.0
    %630 = vmatprep.subr.mxu0 0.0
    %631 = vmatpush1.msra.mxu0 0.0
    %632 = vmatprep.subr.mxu0 0.0
    %633 = vmatpush1.msra.mxu0 0.0
    %634 = vmatprep.subr.mxu0 0.0
    %635 = vmatpush1.msra.mxu0 0.0
    %636 = vmatprep.subr.mxu0 0.0
    %637 = vmatpush1.msra.mxu0 0.0
    %638 = vmatprep.subr.mxu0 0.0
    %639 = vmatpush1.msra.mxu0 0.0
    %640 = vmatprep.subr.mxu0 0.0
    %641 = vmatpush1.msra.mxu0 0.0
    %642 = vmatprep.subr.mxu0 0.0
    %643 = vmatpush1.msra.mxu0 0.0
    %644 = vmatprep.subr.mxu0 0.0
    %645 = vmatpush1.msra.mxu0 0.0
    %646 = vmatprep.subr.mxu0 0.0
    %647 = vmatpush1.msra.mxu0 0.0
    %648 = vmatprep.subr.mxu0 0.0
    %649 = vmatpush1.msra.mxu0 0.0
    %650 = vmatprep.subr.mxu0 0.0
    %651 = vmatpush1.msra.mxu0 0.0
    %652 = vmatprep.subr.mxu0 0.0
    %653 = vmatpush1.msra.mxu0 0.0
    %654 = vmatprep.subr.mxu0 0.0
    %655 = vmatpush1.msra.mxu0 0.0
    %656 = vmatprep.subr.mxu0 0.0
    %657 = vmatpush1.msra.mxu0 0.0
    %658 = vmatprep.subr.mxu0 0.0
    %659 = vmatpush1.msra.mxu0 0.0
    %660 = vmatprep.subr.mxu0 0.0
    %661 = vmatpush1.msra.mxu0 0.0
    %662 = vmatprep.mubr.f32.mxu0 0.0
    %663 = vmatmul.mubr.f32.gmra.mrb[0].mxu0 %v575
    %v664 = vpop.f32.mrb[0].mxu0
    %v665 = vadd.f32 0.0, %v664
    %v666 = vpop.f32.mrb[0].mxu0
    %667 = vmatprep.mubr.f32.mxu0 0.0
    %668 = vmatmul.mubr.f32.gmra.mrb[0].mxu0 %v578
    %v669 = vpop.f32.mrb[0].mxu0
    %v670 = vadd.f32 0.0, %v669
    %v671 = vpop.f32.mrb[0].mxu0
    %672 = vmatprep.mubr.f32.mxu0 0.0
    %673 = vmatmul.mubr.f32.gmra.mrb[0].mxu0 %v581
    %v674 = vpop.f32.mrb[0].mxu0
    %v675 = vadd.f32 0.0, %v674
    %v676 = vpop.f32.mrb[0].mxu0
    %677 = vmatprep.mubr.f32.mxu0 0.0
    %678 = vmatmul.mubr.f32.gmra.mrb[0].mxu0 %v584
    %v679 = vpop.f32.mrb[0].mxu0
    %v680 = vadd.f32 0.0, %v679
    %v681 = vpop.f32.mrb[0].mxu0
    %682 = vmatprep.mubr.f32.mxu0 0.0
    %683 = vmatmul.mubr.f32.gmra.mrb[0].mxu0 %v587
    %v684 = vpop.f32.mrb[0].mxu0
    %v685 = vadd.f32 0.0, %v684
    %v686 = vpop.f32.mrb[0].mxu0
    %687 = vmatprep.mubr.f32.mxu0 0.0
    %688 = vmatmul.mubr.f32.gmra.mrb[0].mxu0 %v590
    %v689 = vpop.f32.mrb[0].mxu0
    %v690 = vadd.f32 0.0, %v689
    %v691 = vpop.f32.mrb[0].mxu0
    %692 = vmatprep.mubr.f32.mxu0 0.0
    %693 = vmatmul.mubr.f32.gmra.mrb[0].mxu0 %v593
    %v694 = vpop.f32.mrb[0].mxu0
    %v695 = vadd.f32 0.0, %v694
    %v696 = vpop.f32.mrb[0].mxu0
    %697 = vmatprep.mubr.f32.mxu0 0.0
    %698 = vmatmul.mubr.f32.gmra.mrb[0].mxu0 %v596
    %v699 = vpop.f32.mrb[0].mxu0
    %v700 = vadd.f32 0.0, %v699
    %v701 = vpop.f32.mrb[0].mxu0
    %702 = vdwg.mxu0
    %v703 = vsel %vm176, %v665, 0.0
    %704 = vadd.xlane.f32.xlu0 %v703
    %v705 = vpop.xlane.xlu0 %704
    %v706 = vsel %vm176, %v670, 0.0
    %707 = vadd.xlane.f32.xlu0 %v706
    %v708 = vpop.xlane.xlu0 %707
    %v709 = vsel %vm176, %v675, 0.0
    %710 = vadd.xlane.f32.xlu0 %v709
    %v711 = vpop.xlane.xlu0 %710
    %v712 = vsel %vm176, %v680, 0.0
    %713 = vadd.xlane.f32.xlu0 %v712
    %v714 = vpop.xlane.xlu0 %713
    %v715 = vsel %vm176, %v685, 0.0
    %716 = vadd.xlane.f32.xlu0 %v715
    %v717 = vpop.xlane.xlu0 %716
    %v718 = vsel %vm176, %v690, 0.0
    %719 = vadd.xlane.f32.xlu0 %v718
    %v720 = vpop.xlane.xlu0 %719
    %v721 = vsel %vm176, %v695, 0.0
    %722 = vadd.xlane.f32.xlu0 %v721
    %v723 = vpop.xlane.xlu0 %722
    %v724 = vsel %vm176, %v700, 0.0
    %725 = vadd.xlane.f32.xlu0 %v724
    %v726 = vpop.xlane.xlu0 %725
    %v727 = vadd.f32 %v705, %v711
    %v728 = vadd.f32 %v727, %v717
    %v729 = vadd.f32 %v728, %v723
    %v730 = vadd.f32 %v708, %v714
    %v731 = vadd.f32 %v730, %v720
    %v732 = vadd.f32 %v731, %v726
    %v733 = vmul.f32 %v729, 0.015625
    %v734 = vmul.f32 %v732, 0.015625
    %v735 = vsub.f32 %v665, %v733
    %v736 = vsub.f32 %v670, %v734
    %v737 = vsub.f32 %v675, %v733
    %v738 = vsub.f32 %v680, %v734
    %v739 = vsub.f32 %v685, %v733
    %v740 = vsub.f32 %v690, %v734
    %v741 = vsub.f32 %v695, %v733
    %v742 = vsub.f32 %v700, %v734
    %v743 = vmul.f32 %v735, %v735
    %v744 = vmul.f32 %v736, %v736
    %v745 = vmul.f32 %v737, %v737
    %v746 = vmul.f32 %v738, %v738
    %v747 = vmul.f32 %v739, %v739
    %v748 = vmul.f32 %v740, %v740
    %v749 = vmul.f32 %v741, %v741
    %v750 = vmul.f32 %v742, %v742
    %v751 = vsel %vm176, %v743, 0.0
    %752 = vadd.xlane.f32.xlu0 %v751
    %v753 = vpop.xlane.xlu0 %752
    %v754 = vsel %vm176, %v744, 0.0
    %755 = vadd.xlane.f32.xlu0 %v754
    %v756 = vpop.xlane.xlu0 %755
    %v757 = vsel %vm176, %v745, 0.0
    %758 = vadd.xlane.f32.xlu0 %v757
    %v759 = vpop.xlane.xlu0 %758
    %v760 = vsel %vm176, %v746, 0.0
    %761 = vadd.xlane.f32.xlu0 %v760
    %v762 = vpop.xlane.xlu0 %761
    %v763 = vsel %vm176, %v747, 0.0
    %764 = vadd.xlane.f32.xlu0 %v763
    %v765 = vpop.xlane.xlu0 %764
    %v766 = vsel %vm176, %v748, 0.0
    %767 = vadd.xlane.f32.xlu0 %v766
    %v768 = vpop.xlane.xlu0 %767
    %v769 = vsel %vm176, %v749, 0.0
    %770 = vadd.xlane.f32.xlu0 %v769
    %v771 = vpop.xlane.xlu0 %770
    %v772 = vsel %vm176, %v750, 0.0
    %773 = vadd.xlane.f32.xlu0 %v772
    %v774 = vpop.xlane.xlu0 %773
    %v775 = vadd.f32 %v753, %v759
    %v776 = vadd.f32 %v775, %v765
    %v777 = vadd.f32 %v776, %v771
    %v778 = vadd.f32 %v756, %v762
    %v779 = vadd.f32 %v778, %v768
    %v780 = vadd.f32 %v779, %v774
    %v781 = vmul.f32 %v777, 0.015625
    %v782 = vmul.f32 %v780, 0.015625
    %v783 = vadd.f32 %v781, 1e-05
    %v784 = vadd.f32 %v782, 1e-05
    %v785 = vrsqrt.pop %v783
    %v786 = vrsqrt.pop %v784
    %v787 = vmul.f32 %v735, %v785
    %v788 = vmul.f32 %v736, %v786
    %v789 = vmul.f32 %v737, %v785
    %v790 = vmul.f32 %v738, %v786
    %v791 = vmul.f32 %v739, %v785
    %v792 = vmul.f32 %v740, %v786
    %v793 = vmul.f32 %v741, %v785
    %v794 = vmul.f32 %v742, %v786
    %795 = vst.msk [vmem:[#allocation2] sm:$0xff] %vm176, %v787
    %796 = vst.msk [vmem:[#allocation2 + $0x8] sm:$0xff] %vm176, %v788
    %797 = vst.msk [vmem:[#allocation2 + $0x10] sm:$0xff] %vm176, %v789
    %798 = vst.msk [vmem:[#allocation2 + $0x18] sm:$0xff] %vm176, %v790
    %799 = vst.msk [vmem:[#allocation2 + $0x20] sm:$0xff] %vm176, %v791
    %800 = vst.msk [vmem:[#allocation2 + $0x28] sm:$0xff] %vm176, %v792
    %801 = vst.msk [vmem:[#allocation2 + $0x30] sm:$0xff] %vm176, %v793
    %802 = vst.msk [vmem:[#allocation2 + $0x38] sm:$0xff] %vm176, %v794
    // Predicated region
    $region34: #{tpu_custom_call.1} parent=1 // pred_check
      _
    $region35: #{tpu_custom_call.1} parent=1 // pred_check_branch
      %804 = sbr.rel (0) target = $region37
    $region36: #{tpu_custom_call.1} parent=1 // pred_region
      %s806 = ssub.s32 1024, 1024
      %807 = vsyncadd [#allocation3], %s806
      %s808 = sshll.u32 [#allocation2], 4
      %s809 = int_to_ptr.vmem [resolvable:$true] %s808
      %814 = dma.vmem_to_hbm [thread:$0]  %s809, 1024, %s8, [#allocation3], 128, 128, 8
    $region37: #{tpu_custom_call.1} parent=1 // pred_fallthru
      _
    // Predicated region
    $region38: #{tpu_custom_call.1} parent=1 // pred_check
      _
    $region39: #{tpu_custom_call.1} parent=1 // pred_check_branch
      %816 = sbr.rel (0) target = $region41
    $region40: #{tpu_custom_call.1} parent=1 // pred_region
      %817 = dma.done [#allocation3], 1024
    $region41: #{tpu_custom_call.1} parent=1 // pred_fallthru
      _
    %818 = vsyncpa [#allocation3], 1

</llo_original>
